<compile_context>
chip_gen: v5e
topology: v5e:2x2
jax: 0.10.0
libtpu: 0.0.40
codegen_flags: <defaults>
</compile_context>

<pallas_src>
import functools

import jax
import jax.numpy as jnp
from jax.experimental import pallas as pl
from jax.experimental.pallas import tpu as pltpu

HIDDEN = 128
NEG_SLOPE = 0.01   # F.leaky_relu default negative_slope
LANE = 128         # vreg lane width
SUBLANE = 8        # f32 sublane height
MAX_TB = 256       # batch tile (MXU-aligned on v6e/v7x; 128-256 is fine on v5e)


def _leaky_relu(x):
    return jnp.where(x > 0, x, NEG_SLOPE * x)


def sac_actor_kernel(x_ref, w1_ref, b1_ref, w2_ref, b2_ref, w3_ref, b3_ref, o_ref):
    # One grid step = one (TB, in_dim) batch tile.  Weights are VMEM-resident
    # (constant index_map).  bf16 goes into the MXU, f32 accumulation; bias add
    # and leaky_relu stay f32 on the VPU.
    x = x_ref[...].astype(jnp.bfloat16)

    h = jnp.dot(x, w1_ref[...], preferred_element_type=jnp.float32) + b1_ref[...]
    h = _leaky_relu(h)

    h = jnp.dot(h.astype(jnp.bfloat16), w2_ref[...],
                preferred_element_type=jnp.float32) + b2_ref[...]
    h = _leaky_relu(h)

    out = jnp.dot(h.astype(jnp.bfloat16), w3_ref[...],
                  preferred_element_type=jnp.float32) + b3_ref[...]
    o_ref[...] = out.astype(o_ref.dtype)


def prepare_params(params):
    """One-time weight prep (do NOT redo per env step):
    transpose PyTorch (out,in) weights to (in,out), cast weights to bf16 for the
    MXU, and zero-pad fc3 to a lane-dense (multiple-of-128) output width."""
    out_dim = params["w3"].shape[0]
    pad_out = (-out_dim) % LANE
    w3_t = jnp.pad(params["w3"].T, ((0, 0), (0, pad_out)))
    b3 = jnp.pad(params["b3"], (0, pad_out))
    prep = {
        "w1": params["w1"].T.astype(jnp.bfloat16),
        "b1": params["b1"].reshape(1, -1).astype(jnp.float32),
        "w2": params["w2"].T.astype(jnp.bfloat16),
        "b2": params["b2"].reshape(1, -1).astype(jnp.float32),
        "w3": w3_t.astype(jnp.bfloat16),
        "b3": b3.reshape(1, -1).astype(jnp.float32),
    }
    return prep, out_dim


@functools.partial(jax.jit, static_argnames=("output_dim",))
def _forward_impl(x, w1, b1, w2, b2, w3, b3, *, output_dim):
    B, in_dim = x.shape
    n_out = w3.shape[1]  # lane-padded output width (multiple of 128)

    # Batch tile: 256 for realistic batches; small batches use a single tile
    # rounded up to the f32 sublane height so the (8,128) constraint holds.
    if B >= MAX_TB:
        tb = MAX_TB
    else:
        tb = max(SUBLANE, ((B + SUBLANE - 1) // SUBLANE) * SUBLANE)
    pad_b = (-B) % tb
    if pad_b:
        x = jnp.pad(x, ((0, pad_b), (0, 0)))
    bp = B + pad_b
    grid = (bp // tb,)

    flops = 2 * bp * (in_dim * HIDDEN + HIDDEN * HIDDEN + HIDDEN * n_out)
    bytes_accessed = (
        bp * in_dim * 4 + bp * n_out * 4
        + (w1.size + w2.size + w3.size) * 2
        + (b1.size + b2.size + b3.size) * 4
    )

    out = pl.pallas_call(
        sac_actor_kernel,
        out_shape=jax.ShapeDtypeStruct((bp, n_out), jnp.float32),
        grid=grid,
        in_specs=[
            pl.BlockSpec((tb, in_dim), lambda i: (i, 0)),        # batch tile (pipelined)
            pl.BlockSpec((in_dim, HIDDEN), lambda i: (0, 0)),    # weights: VMEM-resident
            pl.BlockSpec((1, HIDDEN), lambda i: (0, 0)),
            pl.BlockSpec((HIDDEN, HIDDEN), lambda i: (0, 0)),
            pl.BlockSpec((1, HIDDEN), lambda i: (0, 0)),
            pl.BlockSpec((HIDDEN, n_out), lambda i: (0, 0)),
            pl.BlockSpec((1, n_out), lambda i: (0, 0)),
        ],
        out_specs=pl.BlockSpec((tb, n_out), lambda i: (i, 0)),   # lane-dense store
        compiler_params=pltpu.CompilerParams(
            dimension_semantics=("parallel",)),                  # v7x: 2 TCs share batch
        cost_estimate=pl.CostEstimate(
            flops=flops, transcendentals=0, bytes_accessed=bytes_accessed),
    )(x, w1, b1, w2, b2, w3, b3)

    return out[:B, :output_dim]


def sac_actor_forward(x, prep, output_dim, train=True):
    """Forward pass. `train` only toggles torch.no_grad() in PyTorch -> same math."""
    del train
    return _forward_impl(x, prep["w1"], prep["b1"], prep["w2"], prep["b2"],
                         prep["w3"], prep["b3"], output_dim=output_dim)


# ----------------------------- test utilities ------------------------------

def init_params(key, input_dim, output_dim):
    """Deterministic synthetic init, PyTorch nn.Linear weight layout (out, in)."""
    ks = jax.random.split(key, 6)

    def lin(kw, kb, fan_in, fan_out):
        bound = 1.0 / jnp.sqrt(fan_in)
        w = jax.random.uniform(kw, (fan_out, fan_in), jnp.float32, -bound, bound)
        b = jax.random.uniform(kb, (fan_out,), jnp.float32, -bound, bound)
        return w, b

    w1, b1 = lin(ks[0], ks[1], input_dim, HIDDEN)
    w2, b2 = lin(ks[2], ks[3], HIDDEN, HIDDEN)
    w3, b3 = lin(ks[4], ks[5], HIDDEN, output_dim)
    return {"w1": w1, "b1": b1, "w2": w2, "b2": b2, "w3": w3, "b3": b3}


def reference_forward_f32(x, p):
    h = x @ p["w1"].T + p["b1"]
    h = jnp.where(h > 0, h, NEG_SLOPE * h)
    h = h @ p["w2"].T + p["b2"]
    h = jnp.where(h > 0, h, NEG_SLOPE * h)
    return h @ p["w3"].T + p["b3"]


def reference_forward_bf16(x, p):
    # Same math as the kernel: bf16 operands into the dot, f32 accumulation.
    def dot16(a, b):
        return jnp.dot(a.astype(jnp.bfloat16), b.astype(jnp.bfloat16),
                       preferred_element_type=jnp.float32)
    h = dot16(x, p["w1"].T) + p["b1"]
    h = jnp.where(h > 0, h, NEG_SLOPE * h)
    h = dot16(h, p["w2"].T) + p["b2"]
    h = jnp.where(h > 0, h, NEG_SLOPE * h)
    return dot16(h, p["w3"].T) + p["b3"]


if __name__ == "__main__":
    key = jax.random.PRNGKey(0)
    k_param, k_x1, k_x2 = jax.random.split(key, 3)

    input_dim, output_dim = 32, 8
    params = init_params(k_param, input_dim, output_dim)
    prep, out_dim = prepare_params(params)

    # Small batch (single grid step).
    x_small = jax.random.normal(k_x1, (8, input_dim), jnp.float32)
    out_small = jax.block_until_ready(sac_actor_forward(x_small, prep, out_dim))

    # Non-tile-multiple batch (exercises padded multi-step parallel grid).
    x_big = jax.random.normal(k_x2, (300, input_dim), jnp.float32)
    out_big = jax.block_until_ready(sac_actor_forward(x_big, prep, out_dim))

    for x, out in ((x_small, out_small), (x_big, out_big)):
        assert out.shape == (x.shape[0], output_dim)
        ref16 = reference_forward_bf16(x, params)
        ref32 = reference_forward_f32(x, params)
        assert jnp.allclose(out, ref16, atol=2e-3, rtol=2e-3), "mismatch vs bf16 reference"
        assert jnp.allclose(out, ref32, atol=5e-2, rtol=5e-2), "mismatch vs f32 reference"

    print("KERNEL_OK")
</pallas_src>

<mosaic_0001>
module attributes {stable_mosaic.version = 11 : i64} {
  func.func @sac_actor_kernel(%arg0: i32, %arg1: memref<8x32xf32, #tpu.memory_space<vmem>>, %arg2: memref<32x128xbf16, #tpu.memory_space<vmem>>, %arg3: memref<1x128xf32, #tpu.memory_space<vmem>>, %arg4: memref<128x128xbf16, #tpu.memory_space<vmem>>, %arg5: memref<1x128xf32, #tpu.memory_space<vmem>>, %arg6: memref<128x128xbf16, #tpu.memory_space<vmem>>, %arg7: memref<1x128xf32, #tpu.memory_space<vmem>>, %arg8: memref<8x128xf32, #tpu.memory_space<vmem>>) attributes {dimension_semantics = [#tpu.dimension_semantics<parallel>], iteration_bounds = array<i64: 1>, scalar_prefetch = 0 : i64, scratch_operands = 0 : i64, tpu.core_type = #tpu.core_type<tc>, window_params = [{transform_indices = @transform_0, window_bounds = array<i64: 8, 32>}, {pipeline_mode = #tpu.pipeline_mode<synchronous>, transform_indices = @transform_1, window_bounds = array<i64: 32, 128>}, {pipeline_mode = #tpu.pipeline_mode<synchronous>, transform_indices = @transform_2, window_bounds = array<i64: 1, 128>}, {pipeline_mode = #tpu.pipeline_mode<synchronous>, transform_indices = @transform_3, window_bounds = array<i64: 128, 128>}, {pipeline_mode = #tpu.pipeline_mode<synchronous>, transform_indices = @transform_4, window_bounds = array<i64: 1, 128>}, {pipeline_mode = #tpu.pipeline_mode<synchronous>, transform_indices = @transform_5, window_bounds = array<i64: 128, 128>}, {pipeline_mode = #tpu.pipeline_mode<synchronous>, transform_indices = @transform_6, window_bounds = array<i64: 1, 128>}, {transform_indices = @transform_7, window_bounds = array<i64: 8, 128>}]} {
    %c0 = arith.constant 0 : index
    %c0_0 = arith.constant 0 : index
    %0 = vector.load %arg1[%c0, %c0_0] : memref<8x32xf32, #tpu.memory_space<vmem>>, vector<8x32xf32>
    %1 = arith.truncf %0 : vector<8x32xf32> to vector<8x32xbf16>
    %c0_1 = arith.constant 0 : index
    %c0_2 = arith.constant 0 : index
    %2 = vector.load %arg2[%c0_1, %c0_2] : memref<32x128xbf16, #tpu.memory_space<vmem>>, vector<32x128xbf16>
    %cst = arith.constant dense<0.000000e+00> : vector<8x128xf32>
    %3 = tpu.matmul %1, %2, %cst {dimension_numbers = #tpu.dot_dimension_numbers<[1], [0], [0], [1], [0, 0, 1, 1], [], []>} : vector<8x32xbf16>, vector<32x128xbf16>, vector<8x128xf32> -> vector<8x128xf32>
    %c0_3 = arith.constant 0 : index
    %c0_4 = arith.constant 0 : index
    %4 = vector.load %arg3[%c0_3, %c0_4] : memref<1x128xf32, #tpu.memory_space<vmem>>, vector<1x128xf32>
    %5 = vector.broadcast %4 : vector<1x128xf32> to vector<8x128xf32>
    %6 = arith.addf %3, %5 : vector<8x128xf32>
    %cst_5 = arith.constant 0.000000e+00 : f32
    %7 = vector.broadcast %cst_5 : f32 to vector<8x128xf32>
    %8 = arith.cmpf ogt, %6, %7 : vector<8x128xf32>
    %cst_6 = arith.constant 0.00999999977 : f32
    %9 = vector.broadcast %cst_6 : f32 to vector<8x128xf32>
    %10 = arith.mulf %9, %6 : vector<8x128xf32>
    %11 = arith.select %8, %6, %10 : vector<8x128xi1>, vector<8x128xf32>
    %12 = arith.truncf %11 : vector<8x128xf32> to vector<8x128xbf16>
    %c0_7 = arith.constant 0 : index
    %c0_8 = arith.constant 0 : index
    %13 = vector.load %arg4[%c0_7, %c0_8] : memref<128x128xbf16, #tpu.memory_space<vmem>>, vector<128x128xbf16>
    %cst_9 = arith.constant dense<0.000000e+00> : vector<8x128xf32>
    %14 = tpu.matmul %12, %13, %cst_9 {dimension_numbers = #tpu.dot_dimension_numbers<[1], [0], [0], [1], [0, 0, 1, 1], [], []>} : vector<8x128xbf16>, vector<128x128xbf16>, vector<8x128xf32> -> vector<8x128xf32>
    %c0_10 = arith.constant 0 : index
    %c0_11 = arith.constant 0 : index
    %15 = vector.load %arg5[%c0_10, %c0_11] : memref<1x128xf32, #tpu.memory_space<vmem>>, vector<1x128xf32>
    %16 = vector.broadcast %15 : vector<1x128xf32> to vector<8x128xf32>
    %17 = arith.addf %14, %16 : vector<8x128xf32>
    %cst_12 = arith.constant 0.000000e+00 : f32
    %18 = vector.broadcast %cst_12 : f32 to vector<8x128xf32>
    %19 = arith.cmpf ogt, %17, %18 : vector<8x128xf32>
    %cst_13 = arith.constant 0.00999999977 : f32
    %20 = vector.broadcast %cst_13 : f32 to vector<8x128xf32>
    %21 = arith.mulf %20, %17 : vector<8x128xf32>
    %22 = arith.select %19, %17, %21 : vector<8x128xi1>, vector<8x128xf32>
    %23 = arith.truncf %22 : vector<8x128xf32> to vector<8x128xbf16>
    %c0_14 = arith.constant 0 : index
    %c0_15 = arith.constant 0 : index
    %24 = vector.load %arg6[%c0_14, %c0_15] : memref<128x128xbf16, #tpu.memory_space<vmem>>, vector<128x128xbf16>
    %cst_16 = arith.constant dense<0.000000e+00> : vector<8x128xf32>
    %25 = tpu.matmul %23, %24, %cst_16 {dimension_numbers = #tpu.dot_dimension_numbers<[1], [0], [0], [1], [0, 0, 1, 1], [], []>} : vector<8x128xbf16>, vector<128x128xbf16>, vector<8x128xf32> -> vector<8x128xf32>
    %c0_17 = arith.constant 0 : index
    %c0_18 = arith.constant 0 : index
    %26 = vector.load %arg7[%c0_17, %c0_18] : memref<1x128xf32, #tpu.memory_space<vmem>>, vector<1x128xf32>
    %27 = vector.broadcast %26 : vector<1x128xf32> to vector<8x128xf32>
    %28 = arith.addf %25, %27 : vector<8x128xf32>
    %c0_19 = arith.constant 0 : index
    %c0_20 = arith.constant 0 : index
    %29 = vector.load %arg8[%c0_19, %c0_20] : memref<8x128xf32, #tpu.memory_space<vmem>>, vector<8x128xf32>
    tpu.vector_store %arg8[%c0_19, %c0_20], %28 {strides = array<i32>} : memref<8x128xf32, #tpu.memory_space<vmem>>, vector<8x128xf32>,
    return
  }
  func.func @transform_0(%arg0: i32) -> (i32, i32) {
    %c0_i32 = arith.constant 0 : i32
    %c0_i32_0 = arith.constant 0 : i32
    return %arg0, %c0_i32 : i32, i32
  }
  func.func @transform_1(%arg0: i32) -> (i32, i32) {
    %c0_i32 = arith.constant 0 : i32
    %c0_i32_0 = arith.constant 0 : i32
    %c0_i32_1 = arith.constant 0 : i32
    return %c0_i32, %c0_i32_0 : i32, i32
  }
  func.func @transform_2(%arg0: i32) -> (i32, i32) {
    %c0_i32 = arith.constant 0 : i32
    %c0_i32_0 = arith.constant 0 : i32
    %c0_i32_1 = arith.constant 0 : i32
    return %c0_i32, %c0_i32_0 : i32, i32
  }
  func.func @transform_3(%arg0: i32) -> (i32, i32) {
    %c0_i32 = arith.constant 0 : i32
    %c0_i32_0 = arith.constant 0 : i32
    %c0_i32_1 = arith.constant 0 : i32
    return %c0_i32, %c0_i32_0 : i32, i32
  }
  func.func @transform_4(%arg0: i32) -> (i32, i32) {
    %c0_i32 = arith.constant 0 : i32
    %c0_i32_0 = arith.constant 0 : i32
    %c0_i32_1 = arith.constant 0 : i32
    return %c0_i32, %c0_i32_0 : i32, i32
  }
  func.func @transform_5(%arg0: i32) -> (i32, i32) {
    %c0_i32 = arith.constant 0 : i32
    %c0_i32_0 = arith.constant 0 : i32
    %c0_i32_1 = arith.constant 0 : i32
    return %c0_i32, %c0_i32_0 : i32, i32
  }
  func.func @transform_6(%arg0: i32) -> (i32, i32) {
    %c0_i32 = arith.constant 0 : i32
    %c0_i32_0 = arith.constant 0 : i32
    %c0_i32_1 = arith.constant 0 : i32
    return %c0_i32, %c0_i32_0 : i32, i32
  }
  func.func @transform_7(%arg0: i32) -> (i32, i32) {
    %c0_i32 = arith.constant 0 : i32
    %c0_i32_0 = arith.constant 0 : i32
    return %arg0, %c0_i32 : i32, i32
  }
}

</mosaic_0001>

<llo_original>
// kernel: _forward_impl.1
$region0: #{_forward_impl.1}
  #allocation0 [shape = 'u32[]', space=smem, size = 0x4, offset = 0x4, fixed_abs, tag = 'smem constant byte address 0x4 - core index']
  #allocation1 [shape = 'u32[72,128]{1,0:T(1,128)}', space=vmem, size = 0x9000, scoped, tag = 'internal scratch']
  %s0 = inlined_call_operand.hbm [shape: f32[8,32], index: 0, kind: input, shape index: {}]
  %s1 = inlined_call_operand.hbm [shape: bf16[32,128], index: 1, kind: input, shape index: {}]
  %s2 = inlined_call_operand.vmem [shape: f32[1,128], index: 2, kind: input, shape index: {}]
  %s3 = inlined_call_operand.hbm [shape: bf16[128,128], index: 3, kind: input, shape index: {}]
  %s4 = inlined_call_operand.vmem [shape: f32[1,128], index: 4, kind: input, shape index: {}]
  %s5 = inlined_call_operand.hbm [shape: bf16[128,128], index: 5, kind: input, shape index: {}]
  %s6 = inlined_call_operand.vmem [shape: f32[1,128], index: 6, kind: input, shape index: {}]
  %s7 = inlined_call_operand.hbm [shape: f32[8,128], index: 7, kind: output, shape index: {}]
  %s8 = sld [smem:[#allocation0]]
  $region54: #{_forward_impl.1} parent=0
    _
  %s10 = ssub.s32 1, %s8
  %s11 = scalar_select 0, %s10, %s8
  $region1: #{_forward_impl.1} parent=0
    #allocation2 [shape = 'u8[4096]{0}', space=vmem, size = 0x1000, scoped, tag = 'input window, operand 0, single buffered']
    #allocation3 [shape = 's32[1]{0}', space=sflag, size = 0x4, scoped, tag = 'scoped memory for _forward_impl.1']
    #allocation4 [shape = 's32[1]{0}', space=sflag, size = 0x4, scoped, tag = 'scoped memory for _forward_impl.1']
    #allocation5 [shape = 'u8[8192]{0}', space=vmem, size = 0x2000, scoped, tag = 'input window, operand 1, single buffered']
    #allocation6 [shape = 's32[1]{0}', space=sflag, size = 0x4, scoped, tag = 'scoped memory for _forward_impl.1']
    #allocation7 [shape = 'u8[32768]{0}', space=vmem, size = 0x8000, scoped, tag = 'input window, operand 3, single buffered']
    #allocation8 [shape = 'u8[32768]{0}', space=vmem, size = 0x8000, scoped, tag = 'input window, operand 5, single buffered']
    #allocation9 [shape = 's32[1]{0}', space=sflag, size = 0x4, scoped, tag = 'scoped memory for _forward_impl.1']
    #allocation10 [shape = 'u8[4096]{0}', space=vmem, size = 0x1000, scoped, tag = 'output window, operand 0, single buffered']
    %12 = vsyncpa [#allocation3], 0
    %13 = vsyncpa [#allocation6], 0
    %14 = vsyncpa [#allocation9], 0
    %15 = vsyncpa [#allocation4], 0
    // Predicated region
    $region2: #{_forward_impl.1} parent=1 // pred_check
      _
    $region3: #{_forward_impl.1} parent=1 // pred_check_branch
      %17 = sbr.rel (0) target = $region5
    $region4: #{_forward_impl.1} parent=1 // pred_region
      %19 = vsyncadd [#allocation3], 0
      %s21 = sshll.u32 %s0, 4
      %s22 = int_to_ptr.hbm [resolvable:$true] %s21
      %s23 = sshll.u32 [#allocation2], 4
      %s24 = int_to_ptr.vmem [resolvable:$true] %s23
      %26 = dma.hbm_to_vmem [thread:$0]  %s22, 128, %s24, [#allocation3]
    $region5: #{_forward_impl.1} parent=1 // pred_fallthru
      _
    // Predicated region
    $region6: #{_forward_impl.1} parent=1 // pred_check
      _
    $region7: #{_forward_impl.1} parent=1 // pred_check_branch
      %28 = sbr.rel (0) target = $region9
    $region8: #{_forward_impl.1} parent=1 // pred_region
      %30 = vsyncadd [#allocation6], 0
      %s31 = sshll.u32 %s1, 4
      %s32 = int_to_ptr.hbm [resolvable:$true] %s31
      %s33 = sshll.u32 [#allocation5], 4
      %s34 = int_to_ptr.vmem [resolvable:$true] %s33
      %39 = dma.hbm_to_vmem [thread:$0]  %s32, 256, %s34, [#allocation6], 64, 64, 4
    $region9: #{_forward_impl.1} parent=1 // pred_fallthru
      _
    // Predicated region
    $region10: #{_forward_impl.1} parent=1 // pred_check
      _
    $region11: #{_forward_impl.1} parent=1 // pred_check_branch
      %41 = sbr.rel (0) target = $region13
    $region12: #{_forward_impl.1} parent=1 // pred_region
      _
    $region13: #{_forward_impl.1} parent=1 // pred_fallthru
      _
    // Predicated region
    $region14: #{_forward_impl.1} parent=1 // pred_check
      _
    $region15: #{_forward_impl.1} parent=1 // pred_check_branch
      %43 = sbr.rel (0) target = $region17
    $region16: #{_forward_impl.1} parent=1 // pred_region
      %45 = vsyncadd [#allocation6], 0
      %s46 = sshll.u32 %s3, 4
      %s47 = int_to_ptr.hbm [resolvable:$true] %s46
      %s48 = sshll.u32 [#allocation7], 4
      %s49 = int_to_ptr.vmem [resolvable:$true] %s48
      %54 = dma.hbm_to_vmem [thread:$0]  %s47, 1024, %s49, [#allocation6], 64, 64, 4
    $region17: #{_forward_impl.1} parent=1 // pred_fallthru
      _
    // Predicated region
    $region18: #{_forward_impl.1} parent=1 // pred_check
      _
    $region19: #{_forward_impl.1} parent=1 // pred_check_branch
      %56 = sbr.rel (0) target = $region21
    $region20: #{_forward_impl.1} parent=1 // pred_region
      _
    $region21: #{_forward_impl.1} parent=1 // pred_fallthru
      _
    // Predicated region
    $region22: #{_forward_impl.1} parent=1 // pred_check
      _
    $region23: #{_forward_impl.1} parent=1 // pred_check_branch
      %58 = sbr.rel (0) target = $region25
    $region24: #{_forward_impl.1} parent=1 // pred_region
      %60 = vsyncadd [#allocation9], 0
      %s61 = sshll.u32 %s5, 4
      %s62 = int_to_ptr.hbm [resolvable:$true] %s61
      %s63 = sshll.u32 [#allocation8], 4
      %s64 = int_to_ptr.vmem [resolvable:$true] %s63
      %69 = dma.hbm_to_vmem [thread:$0]  %s62, 1024, %s64, [#allocation9], 64, 64, 4
    $region25: #{_forward_impl.1} parent=1 // pred_fallthru
      _
    // Predicated region
    $region26: #{_forward_impl.1} parent=1 // pred_check
      _
    $region27: #{_forward_impl.1} parent=1 // pred_check_branch
      %71 = sbr.rel (0) target = $region29
    $region28: #{_forward_impl.1} parent=1 // pred_region
      _
    $region29: #{_forward_impl.1} parent=1 // pred_fallthru
      _
    // Predicated region
    $region30: #{_forward_impl.1} parent=1 // pred_check
      _
    $region31: #{_forward_impl.1} parent=1 // pred_check_branch
      %73 = sbr.rel (0) target = $region33
    $region32: #{_forward_impl.1} parent=1 // pred_region
      %75 = dma.done [#allocation3], 128
    $region33: #{_forward_impl.1} parent=1 // pred_fallthru
      _
    // Predicated region
    $region34: #{_forward_impl.1} parent=1 // pred_check
      _
    $region35: #{_forward_impl.1} parent=1 // pred_check_branch
      %77 = sbr.rel (0) target = $region37
    $region36: #{_forward_impl.1} parent=1 // pred_region
      %79 = dma.done [#allocation6], 256
    $region37: #{_forward_impl.1} parent=1 // pred_fallthru
      _
    // Predicated region
    $region38: #{_forward_impl.1} parent=1 // pred_check
      _
    $region39: #{_forward_impl.1} parent=1 // pred_check_branch
      %81 = sbr.rel (0) target = $region41
    $region40: #{_forward_impl.1} parent=1 // pred_region
      %83 = dma.done [#allocation6], 1024
    $region41: #{_forward_impl.1} parent=1 // pred_fallthru
      _
    // Predicated region
    $region42: #{_forward_impl.1} parent=1 // pred_check
      _
    $region43: #{_forward_impl.1} parent=1 // pred_check_branch
      %85 = sbr.rel (0) target = $region45
    $region44: #{_forward_impl.1} parent=1 // pred_region
      %87 = dma.done [#allocation9], 1024
    $region45: #{_forward_impl.1} parent=1 // pred_fallthru
      _
    %v89 = vld [vmem:[#allocation2] sm:$0xff]
    %v90 = vpack.c.bf16 %v89, %v89
    %v91 = vld [vmem:[#allocation5] sm:$0xf]
    %v92 = vld [vmem:[#allocation5 + $0x4] sm:$0xf]
    %v93 = vld [vmem:[#allocation5 + $0x8] sm:$0xf]
    %v94 = vld [vmem:[#allocation5 + $0xc] sm:$0xf]
    %v95 = vld [vmem:[%s2] sm:$0x1]
    %v97 = vperm.slane %v95, 0
    %v103 = vunpack.c.l.b16 %v91
    %v104 = vunpack.c.l.b16 %v92
    %v105 = vunpack.c.l.b16 %v93
    %v106 = vunpack.c.l.b16 %v94
    %v107 = vpack.c.b16 %v104, %v103
    %v108 = vpack.c.b16 %v106, %v105
    %vm111 = vcmask 261120
    %v113 = vsel %vm111, %v90, 0
    %115 = vmatpush.bf16.msra.mxu0 0
    %116 = vmatpush.bf16.msra.mxu0 0
    %117 = vmatpush.bf16.msra.mxu0 0
    %118 = vmatpush.bf16.msra.mxu0 0
    %119 = vmatpush.bf16.msra.mxu0 0
    %120 = vmatpush.bf16.msra.mxu0 0
    %121 = vmatpush.bf16.msra.mxu0 %v108
    %122 = vmatpush.bf16.msra.mxu0 %v107
    %123 = vmatmul.bf16.gmra.mxu0 %v113
    %v124 = vpop.f32.mrf.mxu0
    %v125 = vadd.f32 %v97, %v124
    %v126 = vpop.f32.mrf.mxu0
    %127 = vdwg.mxu0
    %vm128 = vcmp.gt.f32.partialorder %v125, 0.0
    %v129 = vmul.f32 %v125, 0.01
    %v130 = vsel %vm128, %v125, %v129
    %v131 = vpack.c.bf16 %v130, %v130
    %v132 = vld [vmem:[#allocation7] sm:$0xf]
    %v133 = vld [vmem:[#allocation7 + $0x4] sm:$0xf]
    %v134 = vld [vmem:[#allocation7 + $0x8] sm:$0xf]
    %v135 = vld [vmem:[#allocation7 + $0xc] sm:$0xf]
    %v136 = vld [vmem:[#allocation7 + $0x10] sm:$0xf]
    %v137 = vld [vmem:[#allocation7 + $0x14] sm:$0xf]
    %v138 = vld [vmem:[#allocation7 + $0x18] sm:$0xf]
    %v139 = vld [vmem:[#allocation7 + $0x1c] sm:$0xf]
    %v140 = vld [vmem:[#allocation7 + $0x20] sm:$0xf]
    %v141 = vld [vmem:[#allocation7 + $0x24] sm:$0xf]
    %v142 = vld [vmem:[#allocation7 + $0x28] sm:$0xf]
    %v143 = vld [vmem:[#allocation7 + $0x2c] sm:$0xf]
    %v144 = vld [vmem:[#allocation7 + $0x30] sm:$0xf]
    %v145 = vld [vmem:[#allocation7 + $0x34] sm:$0xf]
    %v146 = vld [vmem:[#allocation7 + $0x38] sm:$0xf]
    %v147 = vld [vmem:[#allocation7 + $0x3c] sm:$0xf]
    %v148 = vld [vmem:[%s4] sm:$0x1]
    %v150 = vperm.slane %v148, 0
    %v168 = vunpack.c.l.b16 %v132
    %v169 = vunpack.c.l.b16 %v133
    %v170 = vunpack.c.l.b16 %v134
    %v171 = vunpack.c.l.b16 %v135
    %v172 = vunpack.c.l.b16 %v136
    %v173 = vunpack.c.l.b16 %v137
    %v174 = vunpack.c.l.b16 %v138
    %v175 = vunpack.c.l.b16 %v139
    %v176 = vunpack.c.l.b16 %v140
    %v177 = vunpack.c.l.b16 %v141
    %v178 = vunpack.c.l.b16 %v142
    %v179 = vunpack.c.l.b16 %v143
    %v180 = vunpack.c.l.b16 %v144
    %v181 = vunpack.c.l.b16 %v145
    %v182 = vunpack.c.l.b16 %v146
    %v183 = vunpack.c.l.b16 %v147
    %v184 = vpack.c.b16 %v169, %v168
    %v185 = vpack.c.b16 %v171, %v170
    %v186 = vpack.c.b16 %v173, %v172
    %v187 = vpack.c.b16 %v175, %v174
    %v188 = vpack.c.b16 %v177, %v176
    %v189 = vpack.c.b16 %v179, %v178
    %v190 = vpack.c.b16 %v181, %v180
    %v191 = vpack.c.b16 %v183, %v182
    %200 = vmatpush.bf16.msra.mxu0 %v191
    %201 = vmatpush.bf16.msra.mxu0 %v190
    %202 = vmatpush.bf16.msra.mxu0 %v189
    %203 = vmatpush.bf16.msra.mxu0 %v188
    %204 = vmatpush.bf16.msra.mxu0 %v187
    %205 = vmatpush.bf16.msra.mxu0 %v186
    %206 = vmatpush.bf16.msra.mxu0 %v185
    %207 = vmatpush.bf16.msra.mxu0 %v184
    %208 = vmatmul.bf16.gmra.mxu0 %v131
    %v209 = vpop.f32.mrf.mxu0
    %v210 = vadd.f32 %v150, %v209
    %v211 = vpop.f32.mrf.mxu0
    %212 = vdwg.mxu0
    %vm213 = vcmp.gt.f32.partialorder %v210, 0.0
    %v214 = vmul.f32 %v210, 0.01
    %v215 = vsel %vm213, %v210, %v214
    %v216 = vpack.c.bf16 %v215, %v215
    %v217 = vld [vmem:[#allocation8] sm:$0xf]
    %v218 = vld [vmem:[#allocation8 + $0x4] sm:$0xf]
    %v219 = vld [vmem:[#allocation8 + $0x8] sm:$0xf]
    %v220 = vld [vmem:[#allocation8 + $0xc] sm:$0xf]
    %v221 = vld [vmem:[#allocation8 + $0x10] sm:$0xf]
    %v222 = vld [vmem:[#allocation8 + $0x14] sm:$0xf]
    %v223 = vld [vmem:[#allocation8 + $0x18] sm:$0xf]
    %v224 = vld [vmem:[#allocation8 + $0x1c] sm:$0xf]
    %v225 = vld [vmem:[#allocation8 + $0x20] sm:$0xf]
    %v226 = vld [vmem:[#allocation8 + $0x24] sm:$0xf]
    %v227 = vld [vmem:[#allocation8 + $0x28] sm:$0xf]
    %v228 = vld [vmem:[#allocation8 + $0x2c] sm:$0xf]
    %v229 = vld [vmem:[#allocation8 + $0x30] sm:$0xf]
    %v230 = vld [vmem:[#allocation8 + $0x34] sm:$0xf]
    %v231 = vld [vmem:[#allocation8 + $0x38] sm:$0xf]
    %v232 = vld [vmem:[#allocation8 + $0x3c] sm:$0xf]
    %v233 = vld [vmem:[%s6] sm:$0x1]
    %v235 = vperm.slane %v233, 0
    %v253 = vunpack.c.l.b16 %v217
    %v254 = vunpack.c.l.b16 %v218
    %v255 = vunpack.c.l.b16 %v219
    %v256 = vunpack.c.l.b16 %v220
    %v257 = vunpack.c.l.b16 %v221
    %v258 = vunpack.c.l.b16 %v222
    %v259 = vunpack.c.l.b16 %v223
    %v260 = vunpack.c.l.b16 %v224
    %v261 = vunpack.c.l.b16 %v225
    %v262 = vunpack.c.l.b16 %v226
    %v263 = vunpack.c.l.b16 %v227
    %v264 = vunpack.c.l.b16 %v228
    %v265 = vunpack.c.l.b16 %v229
    %v266 = vunpack.c.l.b16 %v230
    %v267 = vunpack.c.l.b16 %v231
    %v268 = vunpack.c.l.b16 %v232
    %v269 = vpack.c.b16 %v254, %v253
    %v270 = vpack.c.b16 %v256, %v255
    %v271 = vpack.c.b16 %v258, %v257
    %v272 = vpack.c.b16 %v260, %v259
    %v273 = vpack.c.b16 %v262, %v261
    %v274 = vpack.c.b16 %v264, %v263
    %v275 = vpack.c.b16 %v266, %v265
    %v276 = vpack.c.b16 %v268, %v267
    %285 = vmatpush.bf16.msra.mxu0 %v276
    %286 = vmatpush.bf16.msra.mxu0 %v275
    %287 = vmatpush.bf16.msra.mxu0 %v274
    %288 = vmatpush.bf16.msra.mxu0 %v273
    %289 = vmatpush.bf16.msra.mxu0 %v272
    %290 = vmatpush.bf16.msra.mxu0 %v271
    %291 = vmatpush.bf16.msra.mxu0 %v270
    %292 = vmatpush.bf16.msra.mxu0 %v269
    %293 = vmatmul.bf16.gmra.mxu0 %v216
    %v294 = vpop.f32.mrf.mxu0
    %v295 = vadd.f32 %v235, %v294
    %v296 = vpop.f32.mrf.mxu0
    %297 = vdwg.mxu0
    %298 = vst [vmem:[#allocation10] sm:$0xff] %v295
    // Predicated region
    $region46: #{_forward_impl.1} parent=1 // pred_check
      _
    $region47: #{_forward_impl.1} parent=1 // pred_check_branch
      %300 = sbr.rel (0) target = $region49
    $region48: #{_forward_impl.1} parent=1 // pred_region
      %302 = vsyncadd [#allocation4], 0
      %s304 = sshll.u32 [#allocation10], 4
      %s305 = int_to_ptr.vmem [resolvable:$true] %s304
      %s306 = sshll.u32 %s7, 4
      %s307 = int_to_ptr.hbm [resolvable:$true] %s306
      %309 = dma.vmem_to_hbm [thread:$0]  %s305, 128, %s307, [#allocation4]
    $region49: #{_forward_impl.1} parent=1 // pred_fallthru
      _
    // Predicated region
    $region50: #{_forward_impl.1} parent=1 // pred_check
      _
    $region51: #{_forward_impl.1} parent=1 // pred_check_branch
      %311 = sbr.rel (0) target = $region53
    $region52: #{_forward_impl.1} parent=1 // pred_region
      %313 = dma.done [#allocation4], 128
    $region53: #{_forward_impl.1} parent=1 // pred_fallthru
      _
    %314 = vsyncpa [#allocation3], 1
    %315 = vsyncpa [#allocation6], 1
    %316 = vsyncpa [#allocation9], 1
    %317 = vsyncpa [#allocation4], 1

</llo_original>
